<compile_context>
chip_gen: v5e
topology: v5e:2x2
jax: 0.10.0
libtpu: 0.0.40
codegen_flags: <defaults>
</compile_context>

<pallas_src>
import functools

import numpy as np
import jax
import jax.numpy as jnp
from jax.experimental import pallas as pl
from jax.experimental.pallas import tpu as pltpu

_LANES = 128
_MAX_TILE_B = 8192      # lanes per grid step (review: 2048-8192 to start)
_TINY = 1e-30


def _round_up(n, m):
    return ((n + m - 1) // m) * m


def _pad_lanes(x, target):
    b = x.shape[-1]
    if b == target:
        return x
    pad = [(0, 0)] * (x.ndim - 1) + [(0, target - b)]
    return jnp.pad(x, pad)


# ----------------------------------------------------------------------------
# Pallas kernel (hot path): fused Felsenstein merge + new-subtree loglik
# ----------------------------------------------------------------------------

def _fels_merge_kernel(pie_ref, lf_ref, out_ref):
    """Fused Felsenstein pruning step + merged-subtree site log-likelihood.

    Lane n = k*S + s.  Layout (8 sublanes x T lanes):
      pie_ref: rows 0-3 = pi[a] (stationary probs of the merged node),
               row 4 = exp(-branch1), row 5 = exp(-branch2), rows 6-7 = pad.
      lf_ref : rows 0-3 = log f_child1[a], rows 4-7 = log f_child2[a].
      out_ref: rows 0-3 = new log-Felsenstein[a],
               rows 4-7 = per-site data loglik of the merged subtree (bcast).

    Uses exp(b*Q) = e^{-b} I + (1 - e^{-b}) Pi (exact for Q = Pi - I) and
    classic per-site rescaling in probability space, so no (A,A) transition
    matrix is ever materialized and the EUP stream is ~3x shorter than full
    log-space logsumexp.
    """
    pie = pie_ref[...]
    lf = lf_ref[...]
    pi = pie[0:4, :]
    e1 = pie[4:5, :]
    e2 = pie[5:6, :]
    lf1 = lf[0:4, :]
    lf2 = lf[4:8, :]

    def child_contrib(lf_j, e_j):
        m = jnp.max(lf_j, axis=0, keepdims=True)             # (1, T)
        f = jnp.exp(lf_j - m)                                 # (4, T)
        w = jnp.sum(pi * f, axis=0, keepdims=True)            # (1, T)
        p = e_j * f + (1.0 - e_j) * w                         # (4, T)
        return m + jnp.log(jnp.maximum(p, _TINY))             # (4, T)

    new_logf = child_contrib(lf1, e1) + child_contrib(lf2, e2)   # (4, T)

    mo = jnp.max(new_logf, axis=0, keepdims=True)
    ll = mo + jnp.log(jnp.maximum(
        jnp.sum(pi * jnp.exp(new_logf - mo), axis=0, keepdims=True), _TINY))

    T = new_logf.shape[1]
    out_ref[...] = jnp.concatenate(
        [new_logf, jnp.broadcast_to(ll, (4, T))], axis=0)


def fels_merge_pallas(pi_AxKxS, expnb1_K, expnb2_K, lf1_AxKxS, lf2_AxKxS):
    """All operands already lane-dense (A, K, S); returns (new_logf, ll_KxS)."""
    A, K, S = pi_AxKxS.shape
    assert A == 4, "kernel layout assumes alphabet size 4"
    B = K * S
    tile_b = min(_round_up(B, _LANES), _MAX_TILE_B)
    B_pad = _round_up(B, tile_b)
    grid_n = B_pad // tile_b

    eb = jnp.stack([expnb1_K, expnb2_K], axis=0).astype(jnp.float32)   # (2, K)
    eb = jnp.broadcast_to(eb[:, :, None], (2, K, S))
    pad_rows = jnp.zeros((2, K, S), jnp.float32)
    pie = jnp.concatenate(
        [pi_AxKxS.astype(jnp.float32), eb, pad_rows], axis=0)           # (8,K,S)
    pie = _pad_lanes(pie.reshape(8, B), B_pad)

    lf = jnp.concatenate([lf1_AxKxS.astype(jnp.float32),
                          lf2_AxKxS.astype(jnp.float32)], axis=0)       # (8,K,S)
    lf = _pad_lanes(lf.reshape(8, B), B_pad)

    spec = pl.BlockSpec((8, tile_b), lambda i: (0, i))
    out = pl.pallas_call(
        _fels_merge_kernel,
        out_shape=jax.ShapeDtypeStruct((8, B_pad), jnp.float32),
        grid=(grid_n,),
        in_specs=[spec, spec],
        out_specs=spec,
        compiler_params=pltpu.CompilerParams(
            dimension_semantics=("parallel",)),
    )(pie, lf)

    out = out[:, :B]
    new_logf_AxKxS = out[0:4].reshape(A, K, S)
    ll_KxS = out[4].reshape(K, S)
    return new_logf_AxKxS, ll_KxS


# ----------------------------------------------------------------------------
# Plain-JAX helpers (glue, mirrors the torch helper functions)
# ----------------------------------------------------------------------------

def gather_K(arr, idx_K):
    return jax.vmap(lambda a, i: a[i])(arr, idx_K)


def concat_K(arr_Kxr, new_K):
    return jnp.concatenate([arr_Kxr, new_K[:, None].astype(arr_Kxr.dtype)], axis=1)


def replace_with_merged_K(arr, idx1_K, idx2_K, new_val_K):
    """Per particle: drop rows idx1, idx2 (keeping order) and append new value.
    Only used on small (K,t[,D]) arrays now."""
    t = arr.shape[1]

    def one(a, i1, i2, newv):
        ar = jnp.arange(t)
        removed = (ar == i1) | (ar == i2)
        order = jnp.argsort(jnp.where(removed, t + ar, ar))   # kept rows first
        kept = jnp.take(a, order[: t - 2], axis=0)
        return jnp.concatenate([kept, newv[None]], axis=0)

    return jax.vmap(one)(arr, idx1_K, idx2_K, new_val_K)


def compute_log_double_factorials_2N(N):
    ldf = np.zeros(2 * N + 1, dtype=np.float32)
    for i in range(2, 2 * N + 1):
        ldf[i] = ldf[i - 2] + np.log(i)
    return jnp.asarray(ldf)


def build_newick_tree(taxa_N, merge1_r, merge2_r, b1_r, b2_r):
    nodes = list(taxa_N)
    m1 = np.asarray(merge1_r); m2 = np.asarray(merge2_r)
    b1 = np.asarray(b1_r); b2 = np.asarray(b2_r)
    for r in range(len(m1)):
        i1, i2 = int(m1[r]), int(m2[r])
        s = f"({nodes[i1]}:{float(b1[r]):.4f},{nodes[i2]}:{float(b2[r]):.4f})"
        nodes = [n for j, n in enumerate(nodes) if j not in (i1, i2)]
        nodes.append(s)
    return nodes[0] + ";"


# ----------------------------------------------------------------------------
# Deterministic "neural" components (QMatrixDecoder / Proposal stand-ins)
# ----------------------------------------------------------------------------

def init_params(key, S_full, A, D, C):
    ks = jax.random.split(key, 6)
    scale = 0.2
    return {
        "W_enc": scale * jax.random.normal(ks[0], (S_full * A, D), jnp.float32),
        "W_site_enc": scale * jax.random.normal(ks[1], (S_full, C), jnp.float32),
        "W_stat": scale * jax.random.normal(ks[2], (D, A), jnp.float32),
        "W_sitestat": scale * jax.random.normal(ks[3], (C, A), jnp.float32),
        "W_branch": scale * jax.random.normal(ks[4], (2 * D, 2), jnp.float32),
        "b_branch": jnp.zeros((2,), jnp.float32),
        "W_merge": scale * jax.random.normal(ks[5], (2 * D, D), jnp.float32),
    }


def seq_encoder(params, data_NxSxA):
    N = data_NxSxA.shape[0]
    return jnp.tanh(data_NxSxA.reshape(N, -1) @ params["W_enc"])


def site_positions_encoder(params, site_positions_SxSfull):
    return site_positions_SxSfull @ params["W_site_enc"]


def log_stat_probs_VxSxA(params, emb_VxD, site_SxC):
    logits_VxA = emb_VxD @ params["W_stat"]
    logits_SxA = site_SxC @ params["W_sitestat"]
    logits = logits_VxA[:, None, :] + logits_SxA[None, :, :]
    return jax.nn.log_softmax(logits, axis=-1)


def stat_probs_lane_dense_AxKxS(params, emb_KxD, site_SxC):
    """Stationary probs emitted directly in the kernel's lane-dense layout
    (A, K, S): only tiny (K,A)/(S,A) matmul results get transposed, never the
    big (K,S,A) tensor."""
    logits_AxK = (emb_KxD @ params["W_stat"]).T
    logits_AxS = (site_SxC @ params["W_sitestat"]).T
    logits = logits_AxK[:, :, None] + logits_AxS[:, None, :]
    return jax.nn.softmax(logits, axis=0)


def proposal(key, params, leaf_counts_Kxt, embeddings_KxtxD):
    K, t, D = embeddings_KxtxD.shape
    diff = embeddings_KxtxD[:, :, None, :] - embeddings_KxtxD[:, None, :, :]
    dist = jnp.sum(diff * diff, axis=-1)                      # (K,t,t)
    iu = jnp.triu(jnp.ones((t, t), bool), k=1)
    logits = jnp.where(iu[None], -dist, -1e9)
    flat_logits = logits.reshape(K, t * t)
    k_pair, k_branch = jax.random.split(key)
    choice = jax.random.categorical(k_pair, flat_logits)       # (K,)
    idx1 = (choice // t).astype(jnp.int32)
    idx2 = (choice % t).astype(jnp.int32)
    log_v_plus = jax.nn.log_softmax(flat_logits, axis=-1)[jnp.arange(K), choice]

    e1 = gather_K(embeddings_KxtxD, idx1)
    e2 = gather_K(embeddings_KxtxD, idx2)
    feat = jnp.concatenate([e1, e2], axis=-1)                  # (K,2D)
    raw = feat @ params["W_branch"] + params["b_branch"]
    raw = raw + 0.1 * jax.random.normal(k_branch, raw.shape)
    branches = jax.nn.softplus(raw) + 1e-3
    branch1, branch2 = branches[:, 0], branches[:, 1]
    embedding_KxD = jnp.tanh(feat @ params["W_merge"])

    # TODO(synk): log_v_minus uses the standard "number of non-leaf roots after
    # merge" over-counting correction; the exact library definition is not given.
    lc1 = gather_K(leaf_counts_Kxt, idx1)
    lc2 = gather_K(leaf_counts_Kxt, idx2)
    n_internal = (jnp.sum((leaf_counts_Kxt > 1).astype(jnp.int32), axis=1)
                  - (lc1 > 1).astype(jnp.int32) - (lc2 > 1).astype(jnp.int32) + 1)
    log_v_minus = jnp.log(n_internal.astype(jnp.float32))

    return idx1, idx2, branch1, branch2, embedding_KxD, log_v_plus, log_v_minus


# ----------------------------------------------------------------------------
# VCSMC forward (numeric part fully jitted; Newick building stays on host)
# ----------------------------------------------------------------------------

@functools.partial(jax.jit, static_argnames=("K", "prior_dist", "prior_branch_len"))
def _vcsmc_numeric(params, data_NxSxA, data_batched_NxSxA,
                   site_positions_batched_SxSfull, key, *,
                   K, prior_dist, prior_branch_len):
    N, S, A = data_batched_NxSxA.shape
    ldf = compute_log_double_factorials_2N(N)

    site_SxC = site_positions_encoder(params, site_positions_batched_SxSfull)
    emb_NxD = seq_encoder(params, data_NxSxA)

    embeddings_KxtxD = jnp.tile(emb_NxD[None], (K, 1, 1))

    # Fixed node-slot Felsenstein buffer, stored directly in the kernel's
    # lane-dense layout (A, node, K, S).  New nodes are written at a static
    # slot index each step; a tiny (K,t) slot table tracks active subtrees.
    n_nodes = 2 * N - 1
    leaf_fels_AxNxS = jnp.transpose(jnp.log(data_batched_NxSxA), (2, 0, 1))
    node_fels = jnp.zeros((A, n_nodes, K, S), jnp.float32)
    node_fels = node_fels.at[:, :N].set(
        jnp.broadcast_to(leaf_fels_AxNxS[:, :, None, :], (A, N, K, S)))
    slots_Kxt = jnp.tile(jnp.arange(N, dtype=jnp.int32)[None], (K, 1))

    # Incremental per-subtree data log-likelihood cache: only the merged node's
    # term changes each step; leaf terms are computed once here.
    log_stat_leaf_NxSxA = log_stat_probs_VxSxA(params, emb_NxD, site_SxC)
    loglik_leaf_N = jnp.sum(
        jax.scipy.special.logsumexp(
            log_stat_leaf_NxSxA + jnp.log(data_batched_NxSxA), axis=-1), axis=-1)
    loglik_Kxt = jnp.tile(loglik_leaf_N[None], (K, 1))

    merge1 = jnp.zeros((K, 0), jnp.int32)
    merge2 = jnp.zeros((K, 0), jnp.int32)
    blen1 = jnp.zeros((K, 0), jnp.float32)
    blen2 = jnp.zeros((K, 0), jnp.float32)
    leaf_counts = jnp.ones((K, N), jnp.int32)
    log_pi_K = jnp.zeros((K,), jnp.float32)
    log_weight_K = jnp.zeros((K,), jnp.float32)
    log_likelihood_K = jnp.zeros((K,), jnp.float32)
    log_weights_list = []

    arangeK = jnp.arange(K)

    for r in range(N - 1):
        key, k_rs, k_prop = jax.random.split(key, 3)

        # --- resample particles ---
        indexes_K = jax.random.categorical(k_rs, log_weight_K, shape=(K,))
        merge1, merge2 = merge1[indexes_K], merge2[indexes_K]
        blen1, blen2 = blen1[indexes_K], blen2[indexes_K]
        leaf_counts = leaf_counts[indexes_K]
        embeddings_KxtxD = embeddings_KxtxD[indexes_K]
        node_fels = node_fels[:, :, indexes_K, :]
        slots_Kxt = slots_Kxt[indexes_K]
        loglik_Kxt = loglik_Kxt[indexes_K]
        log_pi_K = log_pi_K[indexes_K]
        log_weight_K = log_weight_K[indexes_K]

        # --- proposal ---
        (idx1, idx2, b1, b2, emb_new,
         log_v_plus, log_v_minus) = proposal(k_prop, params, leaf_counts, embeddings_KxtxD)

        merge1 = concat_K(merge1, idx1)
        merge2 = concat_K(merge2, idx2)
        blen1 = concat_K(blen1, b1)
        blen2 = concat_K(blen2, b2)

        lc_new = gather_K(leaf_counts, idx1) + gather_K(leaf_counts, idx2)
        leaf_counts = replace_with_merged_K(leaf_counts, idx1, idx2, lc_new)
        embeddings_KxtxD = replace_with_merged_K(embeddings_KxtxD, idx1, idx2, emb_new)

        # --- children Felsenstein tables, already lane-dense (A, K, S) ---
        slot1_K = gather_K(slots_Kxt, idx1)
        slot2_K = gather_K(slots_Kxt, idx2)
        lf1_AxKxS = node_fels[:, slot1_K, arangeK, :]
        lf2_AxKxS = node_fels[:, slot2_K, arangeK, :]

        # Stationary probs of the merged node (lane-dense); exp(b*Q) is built
        # inside the kernel.
        # TODO(synk): a general QMatrixDecoder would need a generic matrix
        # exponential; the closed form exp(bQ)=e^{-b}I+(1-e^{-b})Pi is exact
        # for this stand-in's F81-style Q = Pi - I.
        pi_AxKxS = stat_probs_lane_dense_AxKxS(params, emb_new, site_SxC)

        new_logf_AxKxS, ll_KxS = fels_merge_pallas(
            pi_AxKxS, jnp.exp(-b1), jnp.exp(-b2), lf1_AxKxS, lf2_AxKxS)

        new_slot = N + r
        node_fels = node_fels.at[:, new_slot].set(new_logf_AxKxS)
        slots_Kxt = replace_with_merged_K(
            slots_Kxt, idx1, idx2, jnp.full((K,), new_slot, jnp.int32))

        loglik_new_K = jnp.sum(ll_KxS, axis=-1)
        loglik_Kxt = replace_with_merged_K(loglik_Kxt, idx1, idx2, loglik_new_K)
        log_likelihood_K = jnp.sum(loglik_Kxt, axis=1)

        # --- priors & weights (plain JAX, tiny) ---
        lam = prior_branch_len
        all_b = jnp.concatenate([blen1, blen2], axis=1)
        # TODO(synk): only the 'exp' prior is implemented; 'gamma' falls back to exp.
        log_branch_prior_K = jnp.sum(-jnp.log(lam) - all_b / lam, axis=1)

        idx_ldf = jnp.clip(2 * leaf_counts - 3, 0, ldf.shape[0] - 1)
        topo_terms = jnp.where(leaf_counts >= 2, ldf[idx_ldf], 0.0)
        log_topo_prior_K = -jnp.sum(topo_terms, axis=1)

        prev_log_pi_K = log_pi_K
        log_pi_K = log_likelihood_K + log_branch_prior_K + log_topo_prior_K
        log_weight_K = log_pi_K - prev_log_pi_K + log_v_minus - log_v_plus
        log_weights_list.append(log_weight_K)

    log_weights_rxK = jnp.stack(log_weights_list)
    log_scaled_weights_rxK = log_weights_rxK - jnp.log(jnp.float32(K))
    log_sum_weights_r = jax.scipy.special.logsumexp(log_scaled_weights_rxK, axis=1)
    log_Z_SMC = jnp.sum(log_sum_weights_r)

    best_idx = jnp.argmax(log_likelihood_K)

    return {
        "log_Z_SMC": log_Z_SMC,
        "log_likelihood_K": log_likelihood_K,
        "best_idx": best_idx,
        "merge1": merge1, "merge2": merge2,
        "blen1": blen1, "blen2": blen2,
    }


def vcsmc_forward(params, data_NxSxA, data_batched_NxSxA,
                  site_positions_batched_SxSfull, taxa_N, *,
                  K, prior_dist="exp", prior_branch_len=1.0, key):
    res = _vcsmc_numeric(params, data_NxSxA, data_batched_NxSxA,
                         site_positions_batched_SxSfull, key,
                         K=K, prior_dist=prior_dist,
                         prior_branch_len=float(prior_branch_len))

    best = int(res["best_idx"])
    # TODO(synk): Newick string construction is host-side Python, no Pallas equivalent.
    best_newick_tree = build_newick_tree(
        taxa_N, res["merge1"][best], res["merge2"][best],
        res["blen1"][best], res["blen2"][best])

    return {
        "log_Z_SMC": res["log_Z_SMC"],
        "log_likelihood_K": res["log_likelihood_K"],
        "best_newick_tree": best_newick_tree,
        "best_merge1_indexes_N1": res["merge1"][best],
        "best_merge2_indexes_N1": res["merge2"][best],
        "best_branch1_lengths_N1": res["blen1"][best],
        "best_branch2_lengths_N1": res["blen2"][best],
    }


# ----------------------------------------------------------------------------
# main
# ----------------------------------------------------------------------------

if __name__ == "__main__":
    N, S_full, A, D, C, K = 6, 16, 4, 8, 4, 8
    taxa_N = [f"taxon{i}" for i in range(N)]

    key = jax.random.PRNGKey(0)
    k_data, k_params, k_smc = jax.random.split(key, 3)

    base = jax.random.randint(k_data, (N, S_full), 0, A)
    onehot = jax.nn.one_hot(base, A, dtype=jnp.float32)
    data_NxSxA = onehot * 0.97 + 0.01          # soft one-hot (avoids log(0))
    data_batched_NxSxA = data_NxSxA            # full-site batch
    site_positions_batched_SxSfull = jnp.eye(S_full, dtype=jnp.float32)

    params = init_params(k_params, S_full, A, D, C)

    result = vcsmc_forward(
        params, data_NxSxA, data_batched_NxSxA, site_positions_batched_SxSfull,
        taxa_N, K=K, prior_dist="exp", prior_branch_len=1.0, key=k_smc)

    jax.block_until_ready(result["log_Z_SMC"])
    jax.block_until_ready(result["log_likelihood_K"])
    print("KERNEL_OK")
</pallas_src>

<mosaic_0001>
module attributes {stable_mosaic.version = 11 : i64} {
  func.func @_fels_merge_kernel(%arg0: i32, %arg1: memref<8x128xf32, #tpu.memory_space<vmem>>, %arg2: memref<8x128xf32, #tpu.memory_space<vmem>>, %arg3: memref<8x128xf32, #tpu.memory_space<vmem>>) attributes {dimension_semantics = [#tpu.dimension_semantics<parallel>], iteration_bounds = array<i64: 1>, scalar_prefetch = 0 : i64, scratch_operands = 0 : i64, tpu.core_type = #tpu.core_type<tc>, window_params = [{transform_indices = @transform_0, window_bounds = array<i64: 8, 128>}, {transform_indices = @transform_1, window_bounds = array<i64: 8, 128>}, {transform_indices = @transform_2, window_bounds = array<i64: 8, 128>}]} {
    %c0 = arith.constant 0 : index
    %c0_0 = arith.constant 0 : index
    %0 = vector.load %arg1[%c0, %c0_0] : memref<8x128xf32, #tpu.memory_space<vmem>>, vector<8x128xf32>
    %c0_1 = arith.constant 0 : index
    %c0_2 = arith.constant 0 : index
    %1 = vector.load %arg2[%c0_1, %c0_2] : memref<8x128xf32, #tpu.memory_space<vmem>>, vector<8x128xf32>
    %2 = vector.extract_strided_slice %0 {offsets = [0, 0], sizes = [4, 128], strides = [1, 1]} : vector<8x128xf32> to vector<4x128xf32>
    %3 = vector.extract_strided_slice %0 {offsets = [4, 0], sizes = [1, 128], strides = [1, 1]} : vector<8x128xf32> to vector<1x128xf32>
    %4 = vector.extract_strided_slice %0 {offsets = [5, 0], sizes = [1, 128], strides = [1, 1]} : vector<8x128xf32> to vector<1x128xf32>
    %5 = vector.extract_strided_slice %1 {offsets = [0, 0], sizes = [4, 128], strides = [1, 1]} : vector<8x128xf32> to vector<4x128xf32>
    %6 = vector.extract_strided_slice %1 {offsets = [4, 0], sizes = [4, 128], strides = [1, 1]} : vector<8x128xf32> to vector<4x128xf32>
    %cst = arith.constant dense<0xFF800000> : vector<128xf32>
    %7 = vector.multi_reduction <maximumf>, %5, %cst [0] : vector<4x128xf32> to vector<128xf32>
    %8 = vector.shape_cast %7 : vector<128xf32> to vector<1x128xf32>
    %9 = vector.broadcast %8 : vector<1x128xf32> to vector<4x128xf32>
    %10 = arith.subf %5, %9 : vector<4x128xf32>
    %11 = math.exp %10 : vector<4x128xf32>
    %12 = arith.mulf %2, %11 : vector<4x128xf32>
    %cst_3 = arith.constant dense<0.000000e+00> : vector<128xf32>
    %13 = vector.multi_reduction <add>, %12, %cst_3 [0] : vector<4x128xf32> to vector<128xf32>
    %14 = vector.shape_cast %13 : vector<128xf32> to vector<1x128xf32>
    %15 = vector.broadcast %3 : vector<1x128xf32> to vector<4x128xf32>
    %16 = arith.mulf %15, %11 : vector<4x128xf32>
    %cst_4 = arith.constant 1.000000e+00 : f32
    %17 = vector.broadcast %cst_4 : f32 to vector<1x128xf32>
    %18 = arith.subf %17, %3 : vector<1x128xf32>
    %19 = arith.mulf %18, %14 : vector<1x128xf32>
    %20 = vector.broadcast %19 : vector<1x128xf32> to vector<4x128xf32>
    %21 = arith.addf %16, %20 : vector<4x128xf32>
    %cst_5 = arith.constant 1.000000e-30 : f32
    %22 = vector.broadcast %cst_5 : f32 to vector<4x128xf32>
    %23 = arith.maximumf %21, %22 : vector<4x128xf32>
    %24 = math.log %23 : vector<4x128xf32>
    %25 = vector.broadcast %8 : vector<1x128xf32> to vector<4x128xf32>
    %26 = arith.addf %25, %24 : vector<4x128xf32>
    %cst_6 = arith.constant dense<0xFF800000> : vector<128xf32>
    %27 = vector.multi_reduction <maximumf>, %6, %cst_6 [0] : vector<4x128xf32> to vector<128xf32>
    %28 = vector.shape_cast %27 : vector<128xf32> to vector<1x128xf32>
    %29 = vector.broadcast %28 : vector<1x128xf32> to vector<4x128xf32>
    %30 = arith.subf %6, %29 : vector<4x128xf32>
    %31 = math.exp %30 : vector<4x128xf32>
    %32 = arith.mulf %2, %31 : vector<4x128xf32>
    %cst_7 = arith.constant dense<0.000000e+00> : vector<128xf32>
    %33 = vector.multi_reduction <add>, %32, %cst_7 [0] : vector<4x128xf32> to vector<128xf32>
    %34 = vector.shape_cast %33 : vector<128xf32> to vector<1x128xf32>
    %35 = vector.broadcast %4 : vector<1x128xf32> to vector<4x128xf32>
    %36 = arith.mulf %35, %31 : vector<4x128xf32>
    %cst_8 = arith.constant 1.000000e+00 : f32
    %37 = vector.broadcast %cst_8 : f32 to vector<1x128xf32>
    %38 = arith.subf %37, %4 : vector<1x128xf32>
    %39 = arith.mulf %38, %34 : vector<1x128xf32>
    %40 = vector.broadcast %39 : vector<1x128xf32> to vector<4x128xf32>
    %41 = arith.addf %36, %40 : vector<4x128xf32>
    %cst_9 = arith.constant 1.000000e-30 : f32
    %42 = vector.broadcast %cst_9 : f32 to vector<4x128xf32>
    %43 = arith.maximumf %41, %42 : vector<4x128xf32>
    %44 = math.log %43 : vector<4x128xf32>
    %45 = vector.broadcast %28 : vector<1x128xf32> to vector<4x128xf32>
    %46 = arith.addf %45, %44 : vector<4x128xf32>
    %47 = arith.addf %26, %46 : vector<4x128xf32>
    %cst_10 = arith.constant dense<0xFF800000> : vector<128xf32>
    %48 = vector.multi_reduction <maximumf>, %47, %cst_10 [0] : vector<4x128xf32> to vector<128xf32>
    %49 = vector.shape_cast %48 : vector<128xf32> to vector<1x128xf32>
    %50 = vector.broadcast %49 : vector<1x128xf32> to vector<4x128xf32>
    %51 = arith.subf %47, %50 : vector<4x128xf32>
    %52 = math.exp %51 : vector<4x128xf32>
    %53 = arith.mulf %2, %52 : vector<4x128xf32>
    %cst_11 = arith.constant dense<0.000000e+00> : vector<128xf32>
    %54 = vector.multi_reduction <add>, %53, %cst_11 [0] : vector<4x128xf32> to vector<128xf32>
    %55 = vector.shape_cast %54 : vector<128xf32> to vector<1x128xf32>
    %cst_12 = arith.constant 1.000000e-30 : f32
    %56 = vector.broadcast %cst_12 : f32 to vector<1x128xf32>
    %57 = arith.maximumf %55, %56 : vector<1x128xf32>
    %58 = math.log %57 : vector<1x128xf32>
    %59 = arith.addf %49, %58 : vector<1x128xf32>
    %60 = vector.shape_cast %59 : vector<1x128xf32> to vector<1x128xf32>
    %61 = vector.broadcast %60 : vector<1x128xf32> to vector<4x128xf32>
    %62 = tpu.concatenate %47, %61 in 0 : vector<4x128xf32>, vector<4x128xf32> -> vector<8x128xf32>
    %c0_13 = arith.constant 0 : index
    %c0_14 = arith.constant 0 : index
    %63 = vector.load %arg3[%c0_13, %c0_14] : memref<8x128xf32, #tpu.memory_space<vmem>>, vector<8x128xf32>
    tpu.vector_store %arg3[%c0_13, %c0_14], %62 {strides = array<i32>} : memref<8x128xf32, #tpu.memory_space<vmem>>, vector<8x128xf32>,
    return
  }
  func.func @transform_0(%arg0: i32) -> (i32, i32) {
    %c0_i32 = arith.constant 0 : i32
    %c0_i32_0 = arith.constant 0 : i32
    return %c0_i32, %arg0 : i32, i32
  }
  func.func @transform_1(%arg0: i32) -> (i32, i32) {
    %c0_i32 = arith.constant 0 : i32
    %c0_i32_0 = arith.constant 0 : i32
    return %c0_i32, %arg0 : i32, i32
  }
  func.func @transform_2(%arg0: i32) -> (i32, i32) {
    %c0_i32 = arith.constant 0 : i32
    %c0_i32_0 = arith.constant 0 : i32
    return %c0_i32, %arg0 : i32, i32
  }
}

</mosaic_0001>

<llo_original>
// kernel: squeeze.130
$region0: #{squeeze.130}
  %s0 = inlined_call_operand.vmem [shape: f32[128], index: 0, kind: input, shape index: {}]
  %s1 = inlined_call_operand.vmem [shape: f32[8,16], index: 1, kind: output, shape index: {}]
  $region1: #{squeeze.130} parent=0
    #allocation0 [shape = 'u8[4096]{0}', space=vmem, size = 0x1000, scoped, tag = 'scoped mem for input reshape']
    %s3 = ssub.s32 2, 1
    %v4 = vld [vmem:[%s0] sm:%s3]
    %5 = vst [vmem:[#allocation0] sm:%s3] %v4
    %v6 = vld [vmem:[#allocation0] sm:$0x1]
    %vm7 = vcmask 130048
    %8 = vst.msk [vmem:[%s1] sm:$0x1] %vm7, %v6
    %v9 = vld [vmem:[#allocation0] sm:$0x1]
    %10 = vrot.lane.b32.xlu0 %v9, 112
    %v11 = vpop.permute.xlu0 %10
    %vm12 = vcmask 130048
    %s13 = scalar_lea.vmem %s1, 1
    %14 = vst.msk [vmem:[%s13] sm:$0x1] %vm12, %v11
    %v15 = vld [vmem:[#allocation0] sm:$0x1]
    %16 = vrot.lane.b32.xlu0 %v15, 96
    %v17 = vpop.permute.xlu0 %16
    %vm18 = vcmask 130048
    %s19 = scalar_lea.vmem %s1, 2
    %20 = vst.msk [vmem:[%s19] sm:$0x1] %vm18, %v17
    %v21 = vld [vmem:[#allocation0] sm:$0x1]
    %22 = vrot.lane.b32.xlu0 %v21, 80
    %v23 = vpop.permute.xlu0 %22
    %vm24 = vcmask 130048
    %s25 = scalar_lea.vmem %s1, 3
    %26 = vst.msk [vmem:[%s25] sm:$0x1] %vm24, %v23
    %v27 = vld [vmem:[#allocation0] sm:$0x1]
    %28 = vrot.lane.b32.xlu0 %v27, 64
    %v29 = vpop.permute.xlu0 %28
    %vm30 = vcmask 130048
    %s31 = scalar_lea.vmem %s1, 4
    %32 = vst.msk [vmem:[%s31] sm:$0x1] %vm30, %v29
    %v33 = vld [vmem:[#allocation0] sm:$0x1]
    %34 = vrot.lane.b32.xlu0 %v33, 48
    %v35 = vpop.permute.xlu0 %34
    %vm36 = vcmask 130048
    %s37 = scalar_lea.vmem %s1, 5
    %38 = vst.msk [vmem:[%s37] sm:$0x1] %vm36, %v35
    %v39 = vld [vmem:[#allocation0] sm:$0x1]
    %40 = vrot.lane.b32.xlu0 %v39, 32
    %v41 = vpop.permute.xlu0 %40
    %vm42 = vcmask 130048
    %s43 = scalar_lea.vmem %s1, 6
    %44 = vst.msk [vmem:[%s43] sm:$0x1] %vm42, %v41
    %v45 = vld [vmem:[#allocation0] sm:$0x1]
    %46 = vrot.lane.b32.xlu0 %v45, 16
    %v47 = vpop.permute.xlu0 %46
    %vm48 = vcmask 130048
    %s49 = scalar_lea.vmem %s1, 7
    %50 = vst.msk [vmem:[%s49] sm:$0x1] %vm48, %v47

// kernel: sub.57
$region0: #{sub.57}
  #allocation0 [shape = 's32[1]{0}', space=sflag, size = 0x4, scoped, tag = 'scoped memory for sub.57']
  %s0 = inlined_call_operand.vmem [shape: f32[8], index: 0, kind: input, shape index: {}]
  %s1 = inlined_call_operand.vmem [shape: f32[8], index: 1, kind: input, shape index: {}]
  %s2 = inlined_call_operand.vmem [shape: f32[8], index: 2, kind: output, shape index: {}]
  %v3 = vld [vmem:[%s0] sm:$0x1]
  %v4 = vld [vmem:[%s1] sm:$0x1]
  %5 = xla_tuple %v3, %v4
  %6 = xla_tuple %5
  %v7 = vsub.f32 %v3, %v4
  %8 = xla_tuple %v7
  %9 = vst [vmem:[%s2] sm:$0x1] %v7

// kernel: _vcsmc_numeric.5
$region0: #{_vcsmc_numeric.5}
  #allocation0 [shape = 'u32[]', space=smem, size = 0x4, offset = 0x4, fixed_abs, tag = 'smem constant byte address 0x4 - core index']
  #allocation1 [shape = 'u32[72,128]{1,0:T(1,128)}', space=vmem, size = 0x9000, scoped, tag = 'internal scratch']
  %s0 = inlined_call_operand.vmem [shape: f32[8,128], index: 0, kind: input, shape index: {}]
  %s1 = inlined_call_operand.vmem [shape: f32[8,128], index: 1, kind: input, shape index: {}]
  %s2 = inlined_call_operand.vmem [shape: f32[8,128], index: 2, kind: output, shape index: {}]
  %s3 = sld [smem:[#allocation0]]
  $region18: #{_vcsmc_numeric.5} parent=0
    _
  %s5 = ssub.s32 1, %s3
  %s6 = scalar_select 0, %s5, %s3
  // Predicated region
  $region2: #{_vcsmc_numeric.5} parent=0 // pred_check
    _
  $region3: #{_vcsmc_numeric.5} parent=0 // pred_check_branch
    %8 = sbr.rel (0) target = $region5
  $region4: #{_vcsmc_numeric.5} parent=0 // pred_region
    _
  $region5: #{_vcsmc_numeric.5} parent=0 // pred_fallthru
    _
  // Predicated region
  $region6: #{_vcsmc_numeric.5} parent=0 // pred_check
    _
  $region7: #{_vcsmc_numeric.5} parent=0 // pred_check_branch
    %10 = sbr.rel (0) target = $region9
  $region8: #{_vcsmc_numeric.5} parent=0 // pred_region
    _
  $region9: #{_vcsmc_numeric.5} parent=0 // pred_fallthru
    _
  %v11 = vld [vmem:[%s0] sm:$0xff]
  %v12 = vld [vmem:[%s1] sm:$0xff]
  %vm13 = vcmask 1043456
  %v14 = vsel %vm13, %v12, -inf
  %v15 = vrot.slane %v14, 4
  %v16 = vmax.f32 %v14, %v15
  %v17 = vrot.slane %v16, 2
  %v18 = vmax.f32 %v16, %v17
  %v19 = vrot.slane %v18, 1
  %v20 = vmax.f32 %v18, %v19
  %v21 = vsub.f32 %v12, %v20
  %v22 = vmul.f32 %v21, 1.442695
  %v23 = vpow.pop %v22
  %v24 = vmul.f32 %v11, %v23
  %v25 = vsel %vm13, %v24, 0.0
  %v26 = vrot.slane %v25, 4
  %v27 = vadd.f32 %v25, %v26
  %v28 = vrot.slane %v27, 2
  %v29 = vadd.f32 %v27, %v28
  %v30 = vrot.slane %v29, 1
  %v31 = vadd.f32 %v29, %v30
  %v32 = vperm.slane %v11, 4
  %v33 = vmul.f32 %v32, %v23
  %v34 = vsub.f32 1.0, %v11
  %v35 = vmul.f32 %v34, %v31
  %v36 = vperm.slane %v35, 4
  %v37 = vadd.f32 %v33, %v36
  %v38 = vmax.f32 %v37, 1e-30
  %v39 = vlog2.pop %v38
  %v40 = vmul.f32 %v39, 0.6931472
  %v41 = vadd.f32 %v20, %v40
  %vm42 = vcmask 1047556
  %v43 = vsel %vm42, %v12, -inf
  %v44 = vrot.slane %v43, 4
  %v45 = vmax.f32 %v43, %v44
  %v46 = vrot.slane %v45, 2
  %v47 = vmax.f32 %v45, %v46
  %v48 = vrot.slane %v47, 1
  %v49 = vmax.f32 %v47, %v48
  %v50 = vsub.f32 %v12, %v49
  %v51 = vmul.f32 %v50, 1.442695
  %v52 = vpow.pop %v51
  %v54 = vrot.slane %v52, 4
  %v56 = vmul.f32 %v11, %v54
  %v57 = vsel %vm13, %v56, 0.0
  %v58 = vrot.slane %v57, 4
  %v59 = vadd.f32 %v57, %v58
  %v60 = vrot.slane %v59, 2
  %v61 = vadd.f32 %v59, %v60
  %v62 = vrot.slane %v61, 1
  %v63 = vadd.f32 %v61, %v62
  %v64 = vperm.slane %v11, 5
  %v65 = vmul.f32 %v64, %v52
  %v66 = vmul.f32 %v34, %v63
  %v67 = vperm.slane %v66, 5
  %v68 = vadd.f32 %v65, %v67
  %v69 = vmax.f32 %v68, 1e-30
  %v70 = vlog2.pop %v69
  %v71 = vmul.f32 %v70, 0.6931472
  %v72 = vadd.f32 %v49, %v71
  %v74 = vrot.slane %v72, 4
  %v76 = vadd.f32 %v41, %v74
  %v77 = vsel %vm13, %v76, -inf
  %v78 = vrot.slane %v77, 4
  %v79 = vmax.f32 %v77, %v78
  %v80 = vrot.slane %v79, 2
  %v81 = vmax.f32 %v79, %v80
  %v82 = vrot.slane %v81, 1
  %v83 = vmax.f32 %v81, %v82
  %v84 = vsub.f32 %v76, %v83
  %v85 = vmul.f32 %v84, 1.442695
  %v86 = vpow.pop %v85
  %v87 = vmul.f32 %v11, %v86
  %v88 = vsel %vm13, %v87, 0.0
  %v89 = vrot.slane %v88, 4
  %v90 = vadd.f32 %v88, %v89
  %v91 = vrot.slane %v90, 2
  %v92 = vadd.f32 %v90, %v91
  %v93 = vrot.slane %v92, 1
  %v94 = vadd.f32 %v92, %v93
  %v95 = vmax.f32 %v94, 1e-30
  %v96 = vlog2.pop %v95
  %v97 = vmul.f32 %v96, 0.6931472
  %v98 = vadd.f32 %v83, %v97
  %v99 = vsel %vm13, %v76, %v98
  %100 = vst [vmem:[%s2] sm:$0xff] %v99
  // Predicated region
  $region10: #{_vcsmc_numeric.5} parent=0 // pred_check
    _
  $region11: #{_vcsmc_numeric.5} parent=0 // pred_check_branch
    %102 = sbr.rel (0) target = $region13
  $region12: #{_vcsmc_numeric.5} parent=0 // pred_region
    _
  $region13: #{_vcsmc_numeric.5} parent=0 // pred_fallthru
    _
  // Predicated region
  $region14: #{_vcsmc_numeric.5} parent=0 // pred_check
    _
  $region15: #{_vcsmc_numeric.5} parent=0 // pred_check_branch
    %104 = sbr.rel (0) target = $region17
  $region16: #{_vcsmc_numeric.5} parent=0 // pred_region
    _
  $region17: #{_vcsmc_numeric.5} parent=0 // pred_fallthru
    _

</llo_original>
